<compile_context>
chip_gen: v7x
topology: tpu7x:2x2x1
jax: 0.10.0
libtpu: 0.0.40
codegen_flags: <defaults>
</compile_context>

<pallas_src>
import jax
import jax.numpy as jnp
from jax.experimental import pallas as pl
from jax.experimental.pallas import tpu as pltpu

HIDDEN_DIM = 200      # hardcoded to 200 in the PyTorch module __init__
HIDDEN_PAD = 256      # lane/MXU-aligned padded hidden width (extra cols are zero)
LEAKY_SLOPE = 0.01    # torch.nn.LeakyReLU default negative_slope
TILE_B_MAX = 512      # batch tile (MXU M dim); multiple of 128 for v5e's 4x128 MXU


def _round_up(n, m):
    return ((n + m - 1) // m) * m


def _leaky_relu(v):
    return jnp.where(v >= 0, v, LEAKY_SLOPE * v)


def discriminator_kernel(x_ref,
                         w_in_ref, b_in_ref,
                         w1_ref, b1_ref,
                         w2_ref, b2_ref,
                         w3_ref, b3_ref,
                         w_out_ref, b_out_ref,
                         o_ref):
    # x: (TILE_B, 1 + c_dim) f32; weights bf16; biases f32.
    # bf16 matmul operands, f32 accumulation; elementwise work stays f32.
    h = jnp.dot(x_ref[...].astype(jnp.bfloat16), w_in_ref[...],
                preferred_element_type=jnp.float32) + b_in_ref[...]
    h = _leaky_relu(h)

    for w_ref, b_ref in ((w1_ref, b1_ref), (w2_ref, b2_ref), (w3_ref, b3_ref)):
        h = jnp.dot(h.astype(jnp.bfloat16), w_ref[...],
                    preferred_element_type=jnp.float32) + b_ref[...]
        h = _leaky_relu(h)

    z = jnp.dot(h.astype(jnp.bfloat16), w_out_ref[...],
                preferred_element_type=jnp.float32) + b_out_ref[...]   # (TILE_B, 1)
    sig = pl.reciprocal(1.0 + jnp.exp(-z))                             # exact form

    # Lane-dense store: relayout the (TILE_B, 1) column into a (1, TILE_B) row
    # so the output writeback is a full-width unmasked vst + dense DMA.
    # (Sublane->lane move goes through the XLU, a slot with slack here.)
    o_ref[...] = sig.reshape(o_ref.shape)


def discriminator_forward(x, packed_params, *, tile_b_max=TILE_B_MAX):
    """x: (B, 1 + c_dim) float32.  packed_params: padded/bf16 (W, b) pairs.

    Returns (B, 1) float32 probabilities, matching the PyTorch module.
    """
    B, in_dim = x.shape

    # Batch tile: full (sublane-rounded) batch for tiny B, otherwise the
    # 128-aligned max tile.  Pad B to a multiple of the tile so every grid
    # step is a full, unmasked tile; pad rows are sliced off below.
    if B >= tile_b_max:
        tile_b = tile_b_max
    else:
        tile_b = _round_up(max(B, 1), 8)
    b_pad = _round_up(B, tile_b)
    if b_pad != B:
        x = jnp.pad(x, ((0, b_pad - B), (0, 0)))
    num_tiles = b_pad // tile_b
    grid = (num_tiles,)

    # x tiled over the batch; weights & biases resident (constant index_map).
    in_specs = [pl.BlockSpec((tile_b, in_dim), lambda i: (i, 0))]
    for p in packed_params:
        in_specs.append(pl.BlockSpec(p.shape, lambda i: (0, 0)))
    # Lane-dense output: one (1, tile_b) row per grid step.
    out_specs = pl.BlockSpec((1, tile_b), lambda i: (i, 0))

    out = pl.pallas_call(
        discriminator_kernel,
        out_shape=jax.ShapeDtypeStruct((num_tiles, tile_b), jnp.float32),
        grid=grid,
        in_specs=in_specs,
        out_specs=out_specs,
        compiler_params=pltpu.CompilerParams(
            # Megacore-shard the batch axis on v7x; no-op elsewhere.
            # TODO(synk): if an xprof on v7x shows one TC idle, switch to
            # pltpu.CORE_PARALLEL for this axis.
            dimension_semantics=("parallel",),
            vmem_limit_bytes=32 << 20),
    )(x, *packed_params)

    # (num_tiles, tile_b) -> (b_pad, 1), drop batch padding.
    return out.reshape(b_pad, 1)[:B]


def init_params(key, c_dim, hidden_dim=HIDDEN_DIM):
    """Logical (unpadded, f32) parameters matching the nn.Linear layers."""
    dims = [(1 + c_dim, hidden_dim),
            (hidden_dim, hidden_dim),
            (hidden_dim, hidden_dim),
            (hidden_dim, hidden_dim),
            (hidden_dim, 1)]
    params = []
    for (fan_in, fan_out) in dims:
        key, kw, kb = jax.random.split(key, 3)
        bound = 1.0 / (fan_in ** 0.5)   # matches nn.Linear's uniform bound
        W = jax.random.uniform(kw, (fan_in, fan_out), jnp.float32,
                               minval=-bound, maxval=bound)
        b = jax.random.uniform(kb, (1, fan_out), jnp.float32,
                               minval=-bound, maxval=bound)
        params.extend([W, b])
    return tuple(params)


def pack_params(params, hidden_pad=HIDDEN_PAD):
    """Zero-pad hidden width 200 -> 256 and cast weights to bf16.

    Padded weight columns/rows and bias entries are zero, so the visible
    outputs are identical to the unpadded 200-wide network.
    """
    (w0, b0, w1, b1, w2, b2, w3, b3, w4, b4) = params

    def pad_w(w, rows, cols):
        return jnp.pad(w, ((0, rows - w.shape[0]), (0, cols - w.shape[1])))

    def pad_b(b, cols):
        return jnp.pad(b, ((0, 0), (0, cols - b.shape[1])))

    in_dim = w0.shape[0]
    return (
        pad_w(w0, in_dim, hidden_pad).astype(jnp.bfloat16), pad_b(b0, hidden_pad),
        pad_w(w1, hidden_pad, hidden_pad).astype(jnp.bfloat16), pad_b(b1, hidden_pad),
        pad_w(w2, hidden_pad, hidden_pad).astype(jnp.bfloat16), pad_b(b2, hidden_pad),
        pad_w(w3, hidden_pad, hidden_pad).astype(jnp.bfloat16), pad_b(b3, hidden_pad),
        pad_w(w4, hidden_pad, 1).astype(jnp.bfloat16), b4,
    )


def reference_forward(x, packed_params):
    """Pure-JAX reference mirroring the kernel's precision scheme
    (bf16 matmul operands, f32 accumulation / elementwise)."""
    (w0, b0, w1, b1, w2, b2, w3, b3, w4, b4) = packed_params

    def dense(h, w, b):
        return jnp.dot(h.astype(jnp.bfloat16), w,
                       preferred_element_type=jnp.float32) + b

    h = _leaky_relu(dense(x, w0, b0))
    h = _leaky_relu(dense(h, w1, b1))
    h = _leaky_relu(dense(h, w2, b2))
    h = _leaky_relu(dense(h, w3, b3))
    z = dense(h, w4, b4)
    return 1.0 / (1.0 + jnp.exp(-z))


if __name__ == "__main__":
    key = jax.random.PRNGKey(0)
    c_dim = 3
    in_dim = 1 + c_dim

    params = init_params(key, c_dim)
    packed = pack_params(params)

    # Small batch (single tiny tile).
    key, kx = jax.random.split(key)
    x_small = jax.random.normal(kx, (8, in_dim), dtype=jnp.float32)
    out_small = jax.block_until_ready(discriminator_forward(x_small, packed))
    ref_small = reference_forward(x_small, packed)
    assert out_small.shape == (8, 1), out_small.shape
    assert jnp.allclose(out_small, ref_small, atol=5e-5, rtol=5e-5)

    # Larger ragged batch: exercises the gridded, lane-dense, batch-padded path
    # (tile_b=512, b_pad=1024, 2 grid steps).
    key, kx2 = jax.random.split(key)
    x_big = jax.random.normal(kx2, (600, in_dim), dtype=jnp.float32)
    out_big = jax.block_until_ready(discriminator_forward(x_big, packed))
    ref_big = reference_forward(x_big, packed)
    assert out_big.shape == (600, 1), out_big.shape
    assert jnp.allclose(out_big, ref_big, atol=5e-5, rtol=5e-5)

    print("KERNEL_OK")
</pallas_src>

<mosaic_0001>
module attributes {stable_mosaic.version = 11 : i64} {
  func.func @discriminator_kernel(%arg0: i32, %arg1: memref<8x4xf32, #tpu.memory_space<vmem>>, %arg2: memref<4x256xbf16, #tpu.memory_space<vmem>>, %arg3: memref<1x256xf32, #tpu.memory_space<vmem>>, %arg4: memref<256x256xbf16, #tpu.memory_space<vmem>>, %arg5: memref<1x256xf32, #tpu.memory_space<vmem>>, %arg6: memref<256x256xbf16, #tpu.memory_space<vmem>>, %arg7: memref<1x256xf32, #tpu.memory_space<vmem>>, %arg8: memref<256x256xbf16, #tpu.memory_space<vmem>>, %arg9: memref<1x256xf32, #tpu.memory_space<vmem>>, %arg10: memref<256x1xbf16, #tpu.memory_space<vmem>>, %arg11: memref<1x1xf32, #tpu.memory_space<vmem>>, %arg12: memref<1x8xf32, #tpu.memory_space<vmem>>) attributes {dimension_semantics = [#tpu.dimension_semantics<parallel>], iteration_bounds = array<i64: 1>, scalar_prefetch = 0 : i64, scratch_operands = 0 : i64, tpu.core_type = #tpu.core_type<tc>, window_params = [{transform_indices = @transform_0, window_bounds = array<i64: 8, 4>}, {pipeline_mode = #tpu.pipeline_mode<synchronous>, transform_indices = @transform_1, window_bounds = array<i64: 4, 256>}, {pipeline_mode = #tpu.pipeline_mode<synchronous>, transform_indices = @transform_2, window_bounds = array<i64: 1, 256>}, {pipeline_mode = #tpu.pipeline_mode<synchronous>, transform_indices = @transform_3, window_bounds = array<i64: 256, 256>}, {pipeline_mode = #tpu.pipeline_mode<synchronous>, transform_indices = @transform_4, window_bounds = array<i64: 1, 256>}, {pipeline_mode = #tpu.pipeline_mode<synchronous>, transform_indices = @transform_5, window_bounds = array<i64: 256, 256>}, {pipeline_mode = #tpu.pipeline_mode<synchronous>, transform_indices = @transform_6, window_bounds = array<i64: 1, 256>}, {pipeline_mode = #tpu.pipeline_mode<synchronous>, transform_indices = @transform_7, window_bounds = array<i64: 256, 256>}, {pipeline_mode = #tpu.pipeline_mode<synchronous>, transform_indices = @transform_8, window_bounds = array<i64: 1, 256>}, {pipeline_mode = #tpu.pipeline_mode<synchronous>, transform_indices = @transform_9, window_bounds = array<i64: 256, 1>}, {pipeline_mode = #tpu.pipeline_mode<synchronous>, transform_indices = @transform_10, window_bounds = array<i64: 1, 1>}, {transform_indices = @transform_11, window_bounds = array<i64: 1, 8>}]} {
    %c0 = arith.constant 0 : index
    %c0_0 = arith.constant 0 : index
    %0 = vector.load %arg1[%c0, %c0_0] : memref<8x4xf32, #tpu.memory_space<vmem>>, vector<8x4xf32>
    %1 = arith.truncf %0 : vector<8x4xf32> to vector<8x4xbf16>
    %c0_1 = arith.constant 0 : index
    %c0_2 = arith.constant 0 : index
    %2 = vector.load %arg2[%c0_1, %c0_2] : memref<4x256xbf16, #tpu.memory_space<vmem>>, vector<4x256xbf16>
    %cst = arith.constant dense<0.000000e+00> : vector<8x256xf32>
    %3 = tpu.matmul %1, %2, %cst {dimension_numbers = #tpu.dot_dimension_numbers<[1], [0], [0], [1], [0, 0, 1, 1], [], []>} : vector<8x4xbf16>, vector<4x256xbf16>, vector<8x256xf32> -> vector<8x256xf32>
    %c0_3 = arith.constant 0 : index
    %c0_4 = arith.constant 0 : index
    %4 = vector.load %arg3[%c0_3, %c0_4] : memref<1x256xf32, #tpu.memory_space<vmem>>, vector<1x256xf32>
    %5 = vector.broadcast %4 : vector<1x256xf32> to vector<8x256xf32>
    %6 = arith.addf %3, %5 : vector<8x256xf32>
    %cst_5 = arith.constant 0.000000e+00 : f32
    %7 = vector.broadcast %cst_5 : f32 to vector<8x256xf32>
    %8 = arith.cmpf oge, %6, %7 : vector<8x256xf32>
    %cst_6 = arith.constant 0.00999999977 : f32
    %9 = vector.broadcast %cst_6 : f32 to vector<8x256xf32>
    %10 = arith.mulf %9, %6 : vector<8x256xf32>
    %11 = arith.select %8, %6, %10 : vector<8x256xi1>, vector<8x256xf32>
    %12 = arith.truncf %11 : vector<8x256xf32> to vector<8x256xbf16>
    %c0_7 = arith.constant 0 : index
    %c0_8 = arith.constant 0 : index
    %13 = vector.load %arg4[%c0_7, %c0_8] : memref<256x256xbf16, #tpu.memory_space<vmem>>, vector<256x256xbf16>
    %cst_9 = arith.constant dense<0.000000e+00> : vector<8x256xf32>
    %14 = tpu.matmul %12, %13, %cst_9 {dimension_numbers = #tpu.dot_dimension_numbers<[1], [0], [0], [1], [0, 0, 1, 1], [], []>} : vector<8x256xbf16>, vector<256x256xbf16>, vector<8x256xf32> -> vector<8x256xf32>
    %c0_10 = arith.constant 0 : index
    %c0_11 = arith.constant 0 : index
    %15 = vector.load %arg5[%c0_10, %c0_11] : memref<1x256xf32, #tpu.memory_space<vmem>>, vector<1x256xf32>
    %16 = vector.broadcast %15 : vector<1x256xf32> to vector<8x256xf32>
    %17 = arith.addf %14, %16 : vector<8x256xf32>
    %cst_12 = arith.constant 0.000000e+00 : f32
    %18 = vector.broadcast %cst_12 : f32 to vector<8x256xf32>
    %19 = arith.cmpf oge, %17, %18 : vector<8x256xf32>
    %cst_13 = arith.constant 0.00999999977 : f32
    %20 = vector.broadcast %cst_13 : f32 to vector<8x256xf32>
    %21 = arith.mulf %20, %17 : vector<8x256xf32>
    %22 = arith.select %19, %17, %21 : vector<8x256xi1>, vector<8x256xf32>
    %23 = arith.truncf %22 : vector<8x256xf32> to vector<8x256xbf16>
    %c0_14 = arith.constant 0 : index
    %c0_15 = arith.constant 0 : index
    %24 = vector.load %arg6[%c0_14, %c0_15] : memref<256x256xbf16, #tpu.memory_space<vmem>>, vector<256x256xbf16>
    %cst_16 = arith.constant dense<0.000000e+00> : vector<8x256xf32>
    %25 = tpu.matmul %23, %24, %cst_16 {dimension_numbers = #tpu.dot_dimension_numbers<[1], [0], [0], [1], [0, 0, 1, 1], [], []>} : vector<8x256xbf16>, vector<256x256xbf16>, vector<8x256xf32> -> vector<8x256xf32>
    %c0_17 = arith.constant 0 : index
    %c0_18 = arith.constant 0 : index
    %26 = vector.load %arg7[%c0_17, %c0_18] : memref<1x256xf32, #tpu.memory_space<vmem>>, vector<1x256xf32>
    %27 = vector.broadcast %26 : vector<1x256xf32> to vector<8x256xf32>
    %28 = arith.addf %25, %27 : vector<8x256xf32>
    %cst_19 = arith.constant 0.000000e+00 : f32
    %29 = vector.broadcast %cst_19 : f32 to vector<8x256xf32>
    %30 = arith.cmpf oge, %28, %29 : vector<8x256xf32>
    %cst_20 = arith.constant 0.00999999977 : f32
    %31 = vector.broadcast %cst_20 : f32 to vector<8x256xf32>
    %32 = arith.mulf %31, %28 : vector<8x256xf32>
    %33 = arith.select %30, %28, %32 : vector<8x256xi1>, vector<8x256xf32>
    %34 = arith.truncf %33 : vector<8x256xf32> to vector<8x256xbf16>
    %c0_21 = arith.constant 0 : index
    %c0_22 = arith.constant 0 : index
    %35 = vector.load %arg8[%c0_21, %c0_22] : memref<256x256xbf16, #tpu.memory_space<vmem>>, vector<256x256xbf16>
    %cst_23 = arith.constant dense<0.000000e+00> : vector<8x256xf32>
    %36 = tpu.matmul %34, %35, %cst_23 {dimension_numbers = #tpu.dot_dimension_numbers<[1], [0], [0], [1], [0, 0, 1, 1], [], []>} : vector<8x256xbf16>, vector<256x256xbf16>, vector<8x256xf32> -> vector<8x256xf32>
    %c0_24 = arith.constant 0 : index
    %c0_25 = arith.constant 0 : index
    %37 = vector.load %arg9[%c0_24, %c0_25] : memref<1x256xf32, #tpu.memory_space<vmem>>, vector<1x256xf32>
    %38 = vector.broadcast %37 : vector<1x256xf32> to vector<8x256xf32>
    %39 = arith.addf %36, %38 : vector<8x256xf32>
    %cst_26 = arith.constant 0.000000e+00 : f32
    %40 = vector.broadcast %cst_26 : f32 to vector<8x256xf32>
    %41 = arith.cmpf oge, %39, %40 : vector<8x256xf32>
    %cst_27 = arith.constant 0.00999999977 : f32
    %42 = vector.broadcast %cst_27 : f32 to vector<8x256xf32>
    %43 = arith.mulf %42, %39 : vector<8x256xf32>
    %44 = arith.select %41, %39, %43 : vector<8x256xi1>, vector<8x256xf32>
    %45 = arith.truncf %44 : vector<8x256xf32> to vector<8x256xbf16>
    %c0_28 = arith.constant 0 : index
    %c0_29 = arith.constant 0 : index
    %46 = vector.load %arg10[%c0_28, %c0_29] : memref<256x1xbf16, #tpu.memory_space<vmem>>, vector<256x1xbf16>
    %cst_30 = arith.constant dense<0.000000e+00> : vector<8x1xf32>
    %47 = tpu.matmul %45, %46, %cst_30 {dimension_numbers = #tpu.dot_dimension_numbers<[1], [0], [0], [1], [0, 0, 1, 1], [], []>} : vector<8x256xbf16>, vector<256x1xbf16>, vector<8x1xf32> -> vector<8x1xf32>
    %c0_31 = arith.constant 0 : index
    %c0_32 = arith.constant 0 : index
    %48 = vector.load %arg11[%c0_31, %c0_32] : memref<1x1xf32, #tpu.memory_space<vmem>>, vector<1x1xf32>
    %49 = vector.broadcast %48 : vector<1x1xf32> to vector<8x1xf32>
    %50 = arith.addf %47, %49 : vector<8x1xf32>
    %cst_33 = arith.constant 0.000000e+00 : f32
    %51 = vector.broadcast %cst_33 : f32 to vector<8x1xf32>
    %52 = arith.subf %51, %50 : vector<8x1xf32>
    %53 = math.exp %52 : vector<8x1xf32>
    %cst_34 = arith.constant 1.000000e+00 : f32
    %54 = vector.broadcast %cst_34 : f32 to vector<8x1xf32>
    %55 = arith.addf %54, %53 : vector<8x1xf32>
    %56 = tpu.reciprocal %55 : vector<8x1xf32> -> vector<8x1xf32>
    %57 = vector.shape_cast %56 : vector<8x1xf32> to vector<1x8xf32>
    %c0_35 = arith.constant 0 : index
    %c0_36 = arith.constant 0 : index
    %58 = vector.load %arg12[%c0_35, %c0_36] : memref<1x8xf32, #tpu.memory_space<vmem>>, vector<1x8xf32>
    tpu.vector_store %arg12[%c0_35, %c0_36], %57 {strides = array<i32>} : memref<1x8xf32, #tpu.memory_space<vmem>>, vector<1x8xf32>,
    return
  }
  func.func @transform_0(%arg0: i32) -> (i32, i32) {
    %c0_i32 = arith.constant 0 : i32
    %c0_i32_0 = arith.constant 0 : i32
    return %arg0, %c0_i32 : i32, i32
  }
  func.func @transform_1(%arg0: i32) -> (i32, i32) {
    %c0_i32 = arith.constant 0 : i32
    %c0_i32_0 = arith.constant 0 : i32
    %c0_i32_1 = arith.constant 0 : i32
    return %c0_i32, %c0_i32_0 : i32, i32
  }
  func.func @transform_2(%arg0: i32) -> (i32, i32) {
    %c0_i32 = arith.constant 0 : i32
    %c0_i32_0 = arith.constant 0 : i32
    %c0_i32_1 = arith.constant 0 : i32
    return %c0_i32, %c0_i32_0 : i32, i32
  }
  func.func @transform_3(%arg0: i32) -> (i32, i32) {
    %c0_i32 = arith.constant 0 : i32
    %c0_i32_0 = arith.constant 0 : i32
    %c0_i32_1 = arith.constant 0 : i32
    return %c0_i32, %c0_i32_0 : i32, i32
  }
  func.func @transform_4(%arg0: i32) -> (i32, i32) {
    %c0_i32 = arith.constant 0 : i32
    %c0_i32_0 = arith.constant 0 : i32
    %c0_i32_1 = arith.constant 0 : i32
    return %c0_i32, %c0_i32_0 : i32, i32
  }
  func.func @transform_5(%arg0: i32) -> (i32, i32) {
    %c0_i32 = arith.constant 0 : i32
    %c0_i32_0 = arith.constant 0 : i32
    %c0_i32_1 = arith.constant 0 : i32
    return %c0_i32, %c0_i32_0 : i32, i32
  }
  func.func @transform_6(%arg0: i32) -> (i32, i32) {
    %c0_i32 = arith.constant 0 : i32
    %c0_i32_0 = arith.constant 0 : i32
    %c0_i32_1 = arith.constant 0 : i32
    return %c0_i32, %c0_i32_0 : i32, i32
  }
  func.func @transform_7(%arg0: i32) -> (i32, i32) {
    %c0_i32 = arith.constant 0 : i32
    %c0_i32_0 = arith.constant 0 : i32
    %c0_i32_1 = arith.constant 0 : i32
    return %c0_i32, %c0_i32_0 : i32, i32
  }
  func.func @transform_8(%arg0: i32) -> (i32, i32) {
    %c0_i32 = arith.constant 0 : i32
    %c0_i32_0 = arith.constant 0 : i32
    %c0_i32_1 = arith.constant 0 : i32
    return %c0_i32, %c0_i32_0 : i32, i32
  }
  func.func @transform_9(%arg0: i32) -> (i32, i32) {
    %c0_i32 = arith.constant 0 : i32
    %c0_i32_0 = arith.constant 0 : i32
    %c0_i32_1 = arith.constant 0 : i32
    return %c0_i32, %c0_i32_0 : i32, i32
  }
  func.func @transform_10(%arg0: i32) -> (i32, i32) {
    %c0_i32 = arith.constant 0 : i32
    %c0_i32_0 = arith.constant 0 : i32
    %c0_i32_1 = arith.constant 0 : i32
    return %c0_i32, %c0_i32_0 : i32, i32
  }
  func.func @transform_11(%arg0: i32) -> (i32, i32) {
    %c0_i32 = arith.constant 0 : i32
    %c0_i32_0 = arith.constant 0 : i32
    return %arg0, %c0_i32 : i32, i32
  }
}

</mosaic_0001>

<llo_original>
// kernel: tpu_custom_call.1
$region0: #{tpu_custom_call.1}
  #allocation0 [shape = 'u32[]', space=smem, size = 0x4, offset = 0x4, fixed_abs, tag = 'smem constant byte address 0x4 - core index']
  #allocation1 [shape = 'u32[144,128]{1,0:T(1,128)}', space=vmem, size = 0x12000, scoped, tag = 'internal scratch']
  #allocation2 [shape = 'f32[1,1]{1,0:T(1,128)S(1)}', space=vmem, size = 0x200, scoped, tag = 'scoped memory for tpu_custom_call.1']
  %s0 = inlined_call_operand.vmem [shape: f32[8,4], index: 0, kind: input, shape index: {}]
  %s1 = inlined_call_operand.vmem [shape: bf16[4,256], index: 1, kind: input, shape index: {}]
  %s2 = inlined_call_operand.vmem [shape: f32[1,256], index: 2, kind: input, shape index: {}]
  %s3 = inlined_call_operand.hbm [shape: bf16[256,256], index: 3, kind: input, shape index: {}]
  %s4 = inlined_call_operand.vmem [shape: f32[1,256], index: 4, kind: input, shape index: {}]
  %s5 = inlined_call_operand.hbm [shape: bf16[256,256], index: 5, kind: input, shape index: {}]
  %s6 = inlined_call_operand.vmem [shape: f32[1,256], index: 6, kind: input, shape index: {}]
  %s7 = inlined_call_operand.hbm [shape: bf16[256,256], index: 7, kind: input, shape index: {}]
  %s8 = inlined_call_operand.vmem [shape: f32[1,256], index: 8, kind: input, shape index: {}]
  %s9 = inlined_call_operand.vmem [shape: bf16[256,1], index: 9, kind: input, shape index: {}]
  %s10 = inlined_call_operand.<no memory space> [shape: f32[1,1], index: 10, kind: input, shape index: {}]
  %s11 = inlined_call_operand.hbm [shape: f32[1,8], index: 11, kind: output, shape index: {}]
  %s12 = sld [smem:[#allocation0]]
  $region66: #{tpu_custom_call.1} parent=0
    _
  %s14 = ssub.s32 1, %s12
  %s15 = scalar_select 0, %s14, %s12
  %v16 = vstv %s10
  %17 = vst [vmem:[#allocation2] sm:$0x1] %v16
  $region1: #{tpu_custom_call.1} parent=0
    #allocation3 [shape = 'u8[131072]{0}', space=vmem, size = 0x20000, scoped, tag = 'input window, operand 3, single buffered']
    #allocation4 [shape = 's32[1]{0}', space=sflag, size = 0x4, scoped, tag = 'scoped memory for tpu_custom_call.1']
    #allocation5 [shape = 's32[1]{0}', space=sflag, size = 0x4, scoped, tag = 'scoped memory for tpu_custom_call.1']
    #allocation6 [shape = 'u8[131072]{0}', space=vmem, size = 0x20000, scoped, tag = 'input window, operand 5, single buffered']
    #allocation7 [shape = 's32[1]{0}', space=sflag, size = 0x4, scoped, tag = 'scoped memory for tpu_custom_call.1']
    #allocation8 [shape = 'u8[131072]{0}', space=vmem, size = 0x20000, scoped, tag = 'input window, operand 7, single buffered']
    #allocation9 [shape = 'u8[512]{0}', space=vmem, size = 0x400, scoped, tag = 'output window, operand 0, single buffered']
    %18 = vsyncpa [#allocation4], 0
    %19 = vsyncpa [#allocation7], 0
    %20 = vsyncpa [#allocation5], 0
    // Predicated region
    $region2: #{tpu_custom_call.1} parent=1 // pred_check
      _
    $region3: #{tpu_custom_call.1} parent=1 // pred_check_branch
      %22 = sbr.rel (0) target = $region5
    $region4: #{tpu_custom_call.1} parent=1 // pred_region
      _
    $region5: #{tpu_custom_call.1} parent=1 // pred_fallthru
      _
    // Predicated region
    $region6: #{tpu_custom_call.1} parent=1 // pred_check
      _
    $region7: #{tpu_custom_call.1} parent=1 // pred_check_branch
      %24 = sbr.rel (0) target = $region9
    $region8: #{tpu_custom_call.1} parent=1 // pred_region
      _
    $region9: #{tpu_custom_call.1} parent=1 // pred_fallthru
      _
    // Predicated region
    $region10: #{tpu_custom_call.1} parent=1 // pred_check
      _
    $region11: #{tpu_custom_call.1} parent=1 // pred_check_branch
      %26 = sbr.rel (0) target = $region13
    $region12: #{tpu_custom_call.1} parent=1 // pred_region
      _
    $region13: #{tpu_custom_call.1} parent=1 // pred_fallthru
      _
    // Predicated region
    $region14: #{tpu_custom_call.1} parent=1 // pred_check
      _
    $region15: #{tpu_custom_call.1} parent=1 // pred_check_branch
      %28 = sbr.rel (0) target = $region17
    $region16: #{tpu_custom_call.1} parent=1 // pred_region
      %s30 = ssub.s32 4096, 4096
      %31 = vsyncadd [#allocation4], %s30
      %s32 = sshll.u32 [#allocation3], 4
      %s33 = int_to_ptr.vmem [resolvable:$true] %s32
      %38 = dma.hbm_to_vmem [thread:$0]  %s3, 4096, %s33, [#allocation4], 128, 128, 8
    $region17: #{tpu_custom_call.1} parent=1 // pred_fallthru
      _
    // Predicated region
    $region18: #{tpu_custom_call.1} parent=1 // pred_check
      _
    $region19: #{tpu_custom_call.1} parent=1 // pred_check_branch
      %40 = sbr.rel (0) target = $region21
    $region20: #{tpu_custom_call.1} parent=1 // pred_region
      _
    $region21: #{tpu_custom_call.1} parent=1 // pred_fallthru
      _
    // Predicated region
    $region22: #{tpu_custom_call.1} parent=1 // pred_check
      _
    $region23: #{tpu_custom_call.1} parent=1 // pred_check_branch
      %42 = sbr.rel (0) target = $region25
    $region24: #{tpu_custom_call.1} parent=1 // pred_region
      %s44 = ssub.s32 4096, 4096
      %45 = vsyncadd [#allocation7], %s44
      %s46 = sshll.u32 [#allocation6], 4
      %s47 = int_to_ptr.vmem [resolvable:$true] %s46
      %52 = dma.hbm_to_vmem [thread:$0]  %s5, 4096, %s47, [#allocation7], 128, 128, 8
    $region25: #{tpu_custom_call.1} parent=1 // pred_fallthru
      _
    // Predicated region
    $region26: #{tpu_custom_call.1} parent=1 // pred_check
      _
    $region27: #{tpu_custom_call.1} parent=1 // pred_check_branch
      %54 = sbr.rel (0) target = $region29
    $region28: #{tpu_custom_call.1} parent=1 // pred_region
      _
    $region29: #{tpu_custom_call.1} parent=1 // pred_fallthru
      _
    // Predicated region
    $region30: #{tpu_custom_call.1} parent=1 // pred_check
      _
    $region31: #{tpu_custom_call.1} parent=1 // pred_check_branch
      %56 = sbr.rel (0) target = $region33
    $region32: #{tpu_custom_call.1} parent=1 // pred_region
      %s58 = ssub.s32 4096, 4096
      %59 = vsyncadd [#allocation7], %s58
      %s60 = sshll.u32 [#allocation8], 4
      %s61 = int_to_ptr.vmem [resolvable:$true] %s60
      %66 = dma.hbm_to_vmem [thread:$0]  %s7, 4096, %s61, [#allocation7], 128, 128, 8
    $region33: #{tpu_custom_call.1} parent=1 // pred_fallthru
      _
    // Predicated region
    $region34: #{tpu_custom_call.1} parent=1 // pred_check
      _
    $region35: #{tpu_custom_call.1} parent=1 // pred_check_branch
      %68 = sbr.rel (0) target = $region37
    $region36: #{tpu_custom_call.1} parent=1 // pred_region
      _
    $region37: #{tpu_custom_call.1} parent=1 // pred_fallthru
      _
    // Predicated region
    $region38: #{tpu_custom_call.1} parent=1 // pred_check
      _
    $region39: #{tpu_custom_call.1} parent=1 // pred_check_branch
      %70 = sbr.rel (0) target = $region41
    $region40: #{tpu_custom_call.1} parent=1 // pred_region
      _
    $region41: #{tpu_custom_call.1} parent=1 // pred_fallthru
      _
    // Predicated region
    $region42: #{tpu_custom_call.1} parent=1 // pred_check
      _
    $region43: #{tpu_custom_call.1} parent=1 // pred_check_branch
      %72 = sbr.rel (0) target = $region45
    $region44: #{tpu_custom_call.1} parent=1 // pred_region
      _
    $region45: #{tpu_custom_call.1} parent=1 // pred_fallthru
      _
    // Predicated region
    $region46: #{tpu_custom_call.1} parent=1 // pred_check
      _
    $region47: #{tpu_custom_call.1} parent=1 // pred_check_branch
      %74 = sbr.rel (0) target = $region49
    $region48: #{tpu_custom_call.1} parent=1 // pred_region
      %75 = dma.done [#allocation4], 4096
    $region49: #{tpu_custom_call.1} parent=1 // pred_fallthru
      _
    // Predicated region
    $region50: #{tpu_custom_call.1} parent=1 // pred_check
      _
    $region51: #{tpu_custom_call.1} parent=1 // pred_check_branch
      %77 = sbr.rel (0) target = $region53
    $region52: #{tpu_custom_call.1} parent=1 // pred_region
      %78 = dma.done [#allocation7], 4096
    $region53: #{tpu_custom_call.1} parent=1 // pred_fallthru
      _
    // Predicated region
    $region54: #{tpu_custom_call.1} parent=1 // pred_check
      _
    $region55: #{tpu_custom_call.1} parent=1 // pred_check_branch
      %80 = sbr.rel (0) target = $region57
    $region56: #{tpu_custom_call.1} parent=1 // pred_region
      %81 = dma.done [#allocation7], 4096
    $region57: #{tpu_custom_call.1} parent=1 // pred_fallthru
      _
    %v83 = vld [vmem:[%s0] sm:$0xff]
    %v84 = vpack.c.bf16 %v83, %v83
    %v85 = vld [vmem:[%s1] sm:$0xf]
    %v86 = vld [vmem:[%s2] sm:$0x3]
    %v88 = vlaneseq
    %v89 = vshrl.u32 %v88, 7
    %v90 = vsub.s32 0, %v89
    %v91 = vrot.slane %v86, %v90
    %v92 = vlaneseq
    %v93 = vshrl.u32 %v92, 7
    %v94 = vsub.s32 1, %v93
    %v95 = vrot.slane %v86, %v94
    %v100 = vunpack.c.l.s4 1983009808
    %v101 = vunpack.c.0.s8 %v100
    %v102 = vlaneseq
    %v103 = vshrl.u32 %v102, 7
    %v104 = vsub.s32 %v101, %v103
    %v105 = vrot.slane %v85, %v104
    %v106 = vcombine.high %v105, %v105
    %vm107 = vcmask 31744
    %v109 = vsel %vm107, %v84, 0
    %vm111 = vcmask 1041408
    %v113 = vsel %vm111, %v105, 0
    %v116 = vsel %vm111, %v106, 0
    %118 = vmatprep.subr.bf16.mxu0 %v116
    %119 = vmatpush1.bf16.msra.mxu0 %v113
    %120 = vmatprep.subr.bf16.mxu0 0
    %121 = vmatpush1.bf16.msra.mxu0 0
    %122 = vmatprep.subr.bf16.mxu0 0
    %123 = vmatpush1.bf16.msra.mxu0 0
    %124 = vmatprep.subr.bf16.mxu0 0
    %125 = vmatpush1.bf16.msra.mxu0 0
    %126 = vmatprep.subr.bf16.mxu0 0
    %127 = vmatpush1.bf16.msra.mxu0 0
    %128 = vmatprep.subr.bf16.mxu0 0
    %129 = vmatpush1.bf16.msra.mxu0 0
    %130 = vmatprep.subr.bf16.mxu0 0
    %131 = vmatpush1.bf16.msra.mxu0 0
    %132 = vmatprep.subr.bf16.mxu0 0
    %133 = vmatpush1.bf16.msra.mxu0 0
    %134 = vmatprep.subr.bf16.mxu0 0
    %135 = vmatpush1.bf16.msra.mxu0 0
    %136 = vmatprep.subr.bf16.mxu0 0
    %137 = vmatpush1.bf16.msra.mxu0 0
    %138 = vmatprep.subr.bf16.mxu0 0
    %139 = vmatpush1.bf16.msra.mxu0 0
    %140 = vmatprep.subr.bf16.mxu0 0
    %141 = vmatpush1.bf16.msra.mxu0 0
    %142 = vmatprep.subr.bf16.mxu0 0
    %143 = vmatpush1.bf16.msra.mxu0 0
    %144 = vmatprep.subr.bf16.mxu0 0
    %145 = vmatpush1.bf16.msra.mxu0 0
    %146 = vmatprep.subr.bf16.mxu0 0
    %147 = vmatpush1.bf16.msra.mxu0 0
    %148 = vmatprep.subr.bf16.mxu0 0
    %149 = vmatpush1.bf16.msra.mxu0 0
    %150 = vmatprep.mubr.bf16.mxu0 0
    %151 = vmatmul.mubr.bf16.gmra.mrb[0].mxu0 %v109
    %v152 = vpop.f32.mrb[0].mxu0
    %v153 = vadd.f32 %v91, %v152
    %v154 = vpop.f32.mrb[0].mxu0
    %v155 = vadd.f32 %v95, %v154
    %v156 = vpop.f32.mrb[0].mxu0
    %v157 = vpop.f32.mrb[0].mxu0
    %158 = vdwg.mxu0
    %vm159 = vcmp.ge.f32.partialorder %v153, 0.0
    %vm160 = vcmp.ge.f32.partialorder %v155, 0.0
    %v161 = vmul.f32 %v153, 0.01
    %v162 = vmul.f32 %v155, 0.01
    %v163 = vsel %vm159, %v153, %v161
    %v164 = vsel %vm160, %v155, %v162
    %v165 = vpack.c.bf16 %v163, %v163
    %v166 = vpack.c.bf16 %v164, %v164
    %v167 = vld [vmem:[#allocation3] sm:$0xff]
    %v168 = vld [vmem:[#allocation3 + $0x8] sm:$0xff]
    %v169 = vld [vmem:[#allocation3 + $0x10] sm:$0xff]
    %v170 = vld [vmem:[#allocation3 + $0x18] sm:$0xff]
    %v171 = vld [vmem:[#allocation3 + $0x20] sm:$0xff]
    %v172 = vld [vmem:[#allocation3 + $0x28] sm:$0xff]
    %v173 = vld [vmem:[#allocation3 + $0x30] sm:$0xff]
    %v174 = vld [vmem:[#allocation3 + $0x38] sm:$0xff]
    %v175 = vld [vmem:[#allocation3 + $0x40] sm:$0xff]
    %v176 = vld [vmem:[#allocation3 + $0x48] sm:$0xff]
    %v177 = vld [vmem:[#allocation3 + $0x50] sm:$0xff]
    %v178 = vld [vmem:[#allocation3 + $0x58] sm:$0xff]
    %v179 = vld [vmem:[#allocation3 + $0x60] sm:$0xff]
    %v180 = vld [vmem:[#allocation3 + $0x68] sm:$0xff]
    %v181 = vld [vmem:[#allocation3 + $0x70] sm:$0xff]
    %v182 = vld [vmem:[#allocation3 + $0x78] sm:$0xff]
    %v183 = vld [vmem:[#allocation3 + $0x80] sm:$0xff]
    %v184 = vld [vmem:[#allocation3 + $0x88] sm:$0xff]
    %v185 = vld [vmem:[#allocation3 + $0x90] sm:$0xff]
    %v186 = vld [vmem:[#allocation3 + $0x98] sm:$0xff]
    %v187 = vld [vmem:[#allocation3 + $0xa0] sm:$0xff]
    %v188 = vld [vmem:[#allocation3 + $0xa8] sm:$0xff]
    %v189 = vld [vmem:[#allocation3 + $0xb0] sm:$0xff]
    %v190 = vld [vmem:[#allocation3 + $0xb8] sm:$0xff]
    %v191 = vld [vmem:[#allocation3 + $0xc0] sm:$0xff]
    %v192 = vld [vmem:[#allocation3 + $0xc8] sm:$0xff]
    %v193 = vld [vmem:[#allocation3 + $0xd0] sm:$0xff]
    %v194 = vld [vmem:[#allocation3 + $0xd8] sm:$0xff]
    %v195 = vld [vmem:[#allocation3 + $0xe0] sm:$0xff]
    %v196 = vld [vmem:[#allocation3 + $0xe8] sm:$0xff]
    %v197 = vld [vmem:[#allocation3 + $0xf0] sm:$0xff]
    %v198 = vld [vmem:[#allocation3 + $0xf8] sm:$0xff]
    %v199 = vld [vmem:[%s4] sm:$0x3]
    %v201 = vlaneseq
    %v202 = vshrl.u32 %v201, 7
    %v203 = vsub.s32 0, %v202
    %v204 = vrot.slane %v199, %v203
    %v205 = vlaneseq
    %v206 = vshrl.u32 %v205, 7
    %v207 = vsub.s32 1, %v206
    %v208 = vrot.slane %v199, %v207
    %v243 = vunpack.c.l.b16 %v167
    %v244 = vunpack.c.h.b16 %v167
    %v245 = vunpack.c.l.b16 %v168
    %v246 = vunpack.c.h.b16 %v168
    %v247 = vunpack.c.l.b16 %v169
    %v248 = vunpack.c.h.b16 %v169
    %v249 = vunpack.c.l.b16 %v170
    %v250 = vunpack.c.h.b16 %v170
    %v251 = vunpack.c.l.b16 %v171
    %v252 = vunpack.c.h.b16 %v171
    %v253 = vunpack.c.l.b16 %v172
    %v254 = vunpack.c.h.b16 %v172
    %v255 = vunpack.c.l.b16 %v173
    %v256 = vunpack.c.h.b16 %v173
    %v257 = vunpack.c.l.b16 %v174
    %v258 = vunpack.c.h.b16 %v174
    %v259 = vunpack.c.l.b16 %v175
    %v260 = vunpack.c.h.b16 %v175
    %v261 = vunpack.c.l.b16 %v176
    %v262 = vunpack.c.h.b16 %v176
    %v263 = vunpack.c.l.b16 %v177
    %v264 = vunpack.c.h.b16 %v177
    %v265 = vunpack.c.l.b16 %v178
    %v266 = vunpack.c.h.b16 %v178
    %v267 = vunpack.c.l.b16 %v179
    %v268 = vunpack.c.h.b16 %v179
    %v269 = vunpack.c.l.b16 %v180
    %v270 = vunpack.c.h.b16 %v180
    %v271 = vunpack.c.l.b16 %v181
    %v272 = vunpack.c.h.b16 %v181
    %v273 = vunpack.c.l.b16 %v182
    %v274 = vunpack.c.h.b16 %v182
    %v275 = vunpack.c.l.b16 %v183
    %v276 = vunpack.c.h.b16 %v183
    %v277 = vunpack.c.l.b16 %v184
    %v278 = vunpack.c.h.b16 %v184
    %v279 = vunpack.c.l.b16 %v185
    %v280 = vunpack.c.h.b16 %v185
    %v281 = vunpack.c.l.b16 %v186
    %v282 = vunpack.c.h.b16 %v186
    %v283 = vunpack.c.l.b16 %v187
    %v284 = vunpack.c.h.b16 %v187
    %v285 = vunpack.c.l.b16 %v188
    %v286 = vunpack.c.h.b16 %v188
    %v287 = vunpack.c.l.b16 %v189
    %v288 = vunpack.c.h.b16 %v189
    %v289 = vunpack.c.l.b16 %v190
    %v290 = vunpack.c.h.b16 %v190
    %v291 = vunpack.c.l.b16 %v191
    %v292 = vunpack.c.h.b16 %v191
    %v293 = vunpack.c.l.b16 %v192
    %v294 = vunpack.c.h.b16 %v192
    %v295 = vunpack.c.l.b16 %v193
    %v296 = vunpack.c.h.b16 %v193
    %v297 = vunpack.c.l.b16 %v194
    %v298 = vunpack.c.h.b16 %v194
    %v299 = vunpack.c.l.b16 %v195
    %v300 = vunpack.c.h.b16 %v195
    %v301 = vunpack.c.l.b16 %v196
    %v302 = vunpack.c.h.b16 %v196
    %v303 = vunpack.c.l.b16 %v197
    %v304 = vunpack.c.h.b16 %v197
    %v305 = vunpack.c.l.b16 %v198
    %v306 = vunpack.c.h.b16 %v198
    %v307 = vpack.c.b16 %v245, %v243
    %v308 = vpack.c.b16 %v246, %v244
    %v309 = vpack.c.b16 %v249, %v247
    %v310 = vpack.c.b16 %v250, %v248
    %v311 = vpack.c.b16 %v253, %v251
    %v312 = vpack.c.b16 %v254, %v252
    %v313 = vpack.c.b16 %v257, %v255
    %v314 = vpack.c.b16 %v258, %v256
    %v315 = vpack.c.b16 %v261, %v259
    %v316 = vpack.c.b16 %v262, %v260
    %v317 = vpack.c.b16 %v265, %v263
    %v318 = vpack.c.b16 %v266, %v264
    %v319 = vpack.c.b16 %v269, %v267
    %v320 = vpack.c.b16 %v270, %v268
    %v321 = vpack.c.b16 %v273, %v271
    %v322 = vpack.c.b16 %v274, %v272
    %v323 = vpack.c.b16 %v277, %v275
    %v324 = vpack.c.b16 %v278, %v276
    %v325 = vpack.c.b16 %v281, %v279
    %v326 = vpack.c.b16 %v282, %v280
    %v327 = vpack.c.b16 %v285, %v283
    %v328 = vpack.c.b16 %v286, %v284
    %v329 = vpack.c.b16 %v289, %v287
    %v330 = vpack.c.b16 %v290, %v288
    %v331 = vpack.c.b16 %v293, %v291
    %v332 = vpack.c.b16 %v294, %v292
    %v333 = vpack.c.b16 %v297, %v295
    %v334 = vpack.c.b16 %v298, %v296
    %v335 = vpack.c.b16 %v301, %v299
    %v336 = vpack.c.b16 %v302, %v300
    %v337 = vpack.c.b16 %v305, %v303
    %v338 = vpack.c.b16 %v306, %v304
    %371 = vmatprep.subr.bf16.mxu0 %v308
    %372 = vmatpush1.bf16.msra.mxu0 %v307
    %373 = vmatprep.subr.bf16.mxu0 %v310
    %374 = vmatpush1.bf16.msra.mxu0 %v309
    %375 = vmatprep.subr.bf16.mxu0 %v312
    %376 = vmatpush1.bf16.msra.mxu0 %v311
    %377 = vmatprep.subr.bf16.mxu0 %v314
    %378 = vmatpush1.bf16.msra.mxu0 %v313
    %379 = vmatprep.subr.bf16.mxu0 %v316
    %380 = vmatpush1.bf16.msra.mxu0 %v315
    %381 = vmatprep.subr.bf16.mxu0 %v318
    %382 = vmatpush1.bf16.msra.mxu0 %v317
    %383 = vmatprep.subr.bf16.mxu0 %v320
    %384 = vmatpush1.bf16.msra.mxu0 %v319
    %385 = vmatprep.subr.bf16.mxu0 %v322
    %386 = vmatpush1.bf16.msra.mxu0 %v321
    %387 = vmatprep.subr.bf16.mxu0 %v324
    %388 = vmatpush1.bf16.msra.mxu0 %v323
    %389 = vmatprep.subr.bf16.mxu0 %v326
    %390 = vmatpush1.bf16.msra.mxu0 %v325
    %391 = vmatprep.subr.bf16.mxu0 %v328
    %392 = vmatpush1.bf16.msra.mxu0 %v327
    %393 = vmatprep.subr.bf16.mxu0 %v330
    %394 = vmatpush1.bf16.msra.mxu0 %v329
    %395 = vmatprep.subr.bf16.mxu0 %v332
    %396 = vmatpush1.bf16.msra.mxu0 %v331
    %397 = vmatprep.subr.bf16.mxu0 %v334
    %398 = vmatpush1.bf16.msra.mxu0 %v333
    %399 = vmatprep.subr.bf16.mxu0 %v336
    %400 = vmatpush1.bf16.msra.mxu0 %v335
    %401 = vmatprep.subr.bf16.mxu0 %v338
    %402 = vmatpush1.bf16.msra.mxu0 %v337
    %403 = vmatprep.mubr.bf16.mxu0 %v166
    %404 = vmatmul.mubr.bf16.gmra.mrb[0].mxu0 %v165
    %v405 = vpop.f32.mrb[0].mxu0
    %v406 = vadd.f32 %v204, %v405
    %v407 = vpop.f32.mrb[0].mxu0
    %v408 = vadd.f32 %v208, %v407
    %v409 = vpop.f32.mrb[0].mxu0
    %v410 = vpop.f32.mrb[0].mxu0
    %411 = vdwg.mxu0
    %vm412 = vcmp.ge.f32.partialorder %v406, 0.0
    %vm413 = vcmp.ge.f32.partialorder %v408, 0.0
    %v414 = vmul.f32 %v406, 0.01
    %v415 = vmul.f32 %v408, 0.01
    %v416 = vsel %vm412, %v406, %v414
    %v417 = vsel %vm413, %v408, %v415
    %v418 = vpack.c.bf16 %v416, %v416
    %v419 = vpack.c.bf16 %v417, %v417
    %v420 = vld [vmem:[#allocation6] sm:$0xff]
    %v421 = vld [vmem:[#allocation6 + $0x8] sm:$0xff]
    %v422 = vld [vmem:[#allocation6 + $0x10] sm:$0xff]
    %v423 = vld [vmem:[#allocation6 + $0x18] sm:$0xff]
    %v424 = vld [vmem:[#allocation6 + $0x20] sm:$0xff]
    %v425 = vld [vmem:[#allocation6 + $0x28] sm:$0xff]
    %v426 = vld [vmem:[#allocation6 + $0x30] sm:$0xff]
    %v427 = vld [vmem:[#allocation6 + $0x38] sm:$0xff]
    %v428 = vld [vmem:[#allocation6 + $0x40] sm:$0xff]
    %v429 = vld [vmem:[#allocation6 + $0x48] sm:$0xff]
    %v430 = vld [vmem:[#allocation6 + $0x50] sm:$0xff]
    %v431 = vld [vmem:[#allocation6 + $0x58] sm:$0xff]
    %v432 = vld [vmem:[#allocation6 + $0x60] sm:$0xff]
    %v433 = vld [vmem:[#allocation6 + $0x68] sm:$0xff]
    %v434 = vld [vmem:[#allocation6 + $0x70] sm:$0xff]
    %v435 = vld [vmem:[#allocation6 + $0x78] sm:$0xff]
    %v436 = vld [vmem:[#allocation6 + $0x80] sm:$0xff]
    %v437 = vld [vmem:[#allocation6 + $0x88] sm:$0xff]
    %v438 = vld [vmem:[#allocation6 + $0x90] sm:$0xff]
    %v439 = vld [vmem:[#allocation6 + $0x98] sm:$0xff]
    %v440 = vld [vmem:[#allocation6 + $0xa0] sm:$0xff]
    %v441 = vld [vmem:[#allocation6 + $0xa8] sm:$0xff]
    %v442 = vld [vmem:[#allocation6 + $0xb0] sm:$0xff]
    %v443 = vld [vmem:[#allocation6 + $0xb8] sm:$0xff]
    %v444 = vld [vmem:[#allocation6 + $0xc0] sm:$0xff]
    %v445 = vld [vmem:[#allocation6 + $0xc8] sm:$0xff]
    %v446 = vld [vmem:[#allocation6 + $0xd0] sm:$0xff]
    %v447 = vld [vmem:[#allocation6 + $0xd8] sm:$0xff]
    %v448 = vld [vmem:[#allocation6 + $0xe0] sm:$0xff]
    %v449 = vld [vmem:[#allocation6 + $0xe8] sm:$0xff]
    %v450 = vld [vmem:[#allocation6 + $0xf0] sm:$0xff]
    %v451 = vld [vmem:[#allocation6 + $0xf8] sm:$0xff]
    %v452 = vld [vmem:[%s6] sm:$0x3]
    %v454 = vlaneseq
    %v455 = vshrl.u32 %v454, 7
    %v456 = vsub.s32 0, %v455
    %v457 = vrot.slane %v452, %v456
    %v458 = vlaneseq
    %v459 = vshrl.u32 %v458, 7
    %v460 = vsub.s32 1, %v459
    %v461 = vrot.slane %v452, %v460
    %v496 = vunpack.c.l.b16 %v420
    %v497 = vunpack.c.h.b16 %v420
    %v498 = vunpack.c.l.b16 %v421
    %v499 = vunpack.c.h.b16 %v421
    %v500 = vunpack.c.l.b16 %v422
    %v501 = vunpack.c.h.b16 %v422
    %v502 = vunpack.c.l.b16 %v423
    %v503 = vunpack.c.h.b16 %v423
    %v504 = vunpack.c.l.b16 %v424
    %v505 = vunpack.c.h.b16 %v424
    %v506 = vunpack.c.l.b16 %v425
    %v507 = vunpack.c.h.b16 %v425
    %v508 = vunpack.c.l.b16 %v426
    %v509 = vunpack.c.h.b16 %v426
    %v510 = vunpack.c.l.b16 %v427
    %v511 = vunpack.c.h.b16 %v427
    %v512 = vunpack.c.l.b16 %v428
    %v513 = vunpack.c.h.b16 %v428
    %v514 = vunpack.c.l.b16 %v429
    %v515 = vunpack.c.h.b16 %v429
    %v516 = vunpack.c.l.b16 %v430
    %v517 = vunpack.c.h.b16 %v430
    %v518 = vunpack.c.l.b16 %v431
    %v519 = vunpack.c.h.b16 %v431
    %v520 = vunpack.c.l.b16 %v432
    %v521 = vunpack.c.h.b16 %v432
    %v522 = vunpack.c.l.b16 %v433
    %v523 = vunpack.c.h.b16 %v433
    %v524 = vunpack.c.l.b16 %v434
    %v525 = vunpack.c.h.b16 %v434
    %v526 = vunpack.c.l.b16 %v435
    %v527 = vunpack.c.h.b16 %v435
    %v528 = vunpack.c.l.b16 %v436
    %v529 = vunpack.c.h.b16 %v436
    %v530 = vunpack.c.l.b16 %v437
    %v531 = vunpack.c.h.b16 %v437
    %v532 = vunpack.c.l.b16 %v438
    %v533 = vunpack.c.h.b16 %v438
    %v534 = vunpack.c.l.b16 %v439
    %v535 = vunpack.c.h.b16 %v439
    %v536 = vunpack.c.l.b16 %v440
    %v537 = vunpack.c.h.b16 %v440
    %v538 = vunpack.c.l.b16 %v441
    %v539 = vunpack.c.h.b16 %v441
    %v540 = vunpack.c.l.b16 %v442
    %v541 = vunpack.c.h.b16 %v442
    %v542 = vunpack.c.l.b16 %v443
    %v543 = vunpack.c.h.b16 %v443
    %v544 = vunpack.c.l.b16 %v444
    %v545 = vunpack.c.h.b16 %v444
    %v546 = vunpack.c.l.b16 %v445
    %v547 = vunpack.c.h.b16 %v445
    %v548 = vunpack.c.l.b16 %v446
    %v549 = vunpack.c.h.b16 %v446
    %v550 = vunpack.c.l.b16 %v447
    %v551 = vunpack.c.h.b16 %v447
    %v552 = vunpack.c.l.b16 %v448
    %v553 = vunpack.c.h.b16 %v448
    %v554 = vunpack.c.l.b16 %v449
    %v555 = vunpack.c.h.b16 %v449
    %v556 = vunpack.c.l.b16 %v450
    %v557 = vunpack.c.h.b16 %v450
    %v558 = vunpack.c.l.b16 %v451
    %v559 = vunpack.c.h.b16 %v451
    %v560 = vpack.c.b16 %v498, %v496
    %v561 = vpack.c.b16 %v499, %v497
    %v562 = vpack.c.b16 %v502, %v500
    %v563 = vpack.c.b16 %v503, %v501
    %v564 = vpack.c.b16 %v506, %v504
    %v565 = vpack.c.b16 %v507, %v505
    %v566 = vpack.c.b16 %v510, %v508
    %v567 = vpack.c.b16 %v511, %v509
    %v568 = vpack.c.b16 %v514, %v512
    %v569 = vpack.c.b16 %v515, %v513
    %v570 = vpack.c.b16 %v518, %v516
    %v571 = vpack.c.b16 %v519, %v517
    %v572 = vpack.c.b16 %v522, %v520
    %v573 = vpack.c.b16 %v523, %v521
    %v574 = vpack.c.b16 %v526, %v524
    %v575 = vpack.c.b16 %v527, %v525
    %v576 = vpack.c.b16 %v530, %v528
    %v577 = vpack.c.b16 %v531, %v529
    %v578 = vpack.c.b16 %v534, %v532
    %v579 = vpack.c.b16 %v535, %v533
    %v580 = vpack.c.b16 %v538, %v536
    %v581 = vpack.c.b16 %v539, %v537
    %v582 = vpack.c.b16 %v542, %v540
    %v583 = vpack.c.b16 %v543, %v541
    %v584 = vpack.c.b16 %v546, %v544
    %v585 = vpack.c.b16 %v547, %v545
    %v586 = vpack.c.b16 %v550, %v548
    %v587 = vpack.c.b16 %v551, %v549
    %v588 = vpack.c.b16 %v554, %v552
    %v589 = vpack.c.b16 %v555, %v553
    %v590 = vpack.c.b16 %v558, %v556
    %v591 = vpack.c.b16 %v559, %v557
    %624 = vmatprep.subr.bf16.mxu0 %v561
    %625 = vmatpush1.bf16.msra.mxu0 %v560
    %626 = vmatprep.subr.bf16.mxu0 %v563
    %627 = vmatpush1.bf16.msra.mxu0 %v562
    %628 = vmatprep.subr.bf16.mxu0 %v565
    %629 = vmatpush1.bf16.msra.mxu0 %v564
    %630 = vmatprep.subr.bf16.mxu0 %v567
    %631 = vmatpush1.bf16.msra.mxu0 %v566
    %632 = vmatprep.subr.bf16.mxu0 %v569
    %633 = vmatpush1.bf16.msra.mxu0 %v568
    %634 = vmatprep.subr.bf16.mxu0 %v571
    %635 = vmatpush1.bf16.msra.mxu0 %v570
    %636 = vmatprep.subr.bf16.mxu0 %v573
    %637 = vmatpush1.bf16.msra.mxu0 %v572
    %638 = vmatprep.subr.bf16.mxu0 %v575
    %639 = vmatpush1.bf16.msra.mxu0 %v574
    %640 = vmatprep.subr.bf16.mxu0 %v577
    %641 = vmatpush1.bf16.msra.mxu0 %v576
    %642 = vmatprep.subr.bf16.mxu0 %v579
    %643 = vmatpush1.bf16.msra.mxu0 %v578
    %644 = vmatprep.subr.bf16.mxu0 %v581
    %645 = vmatpush1.bf16.msra.mxu0 %v580
    %646 = vmatprep.subr.bf16.mxu0 %v583
    %647 = vmatpush1.bf16.msra.mxu0 %v582
    %648 = vmatprep.subr.bf16.mxu0 %v585
    %649 = vmatpush1.bf16.msra.mxu0 %v584
    %650 = vmatprep.subr.bf16.mxu0 %v587
    %651 = vmatpush1.bf16.msra.mxu0 %v586
    %652 = vmatprep.subr.bf16.mxu0 %v589
    %653 = vmatpush1.bf16.msra.mxu0 %v588
    %654 = vmatprep.subr.bf16.mxu0 %v591
    %655 = vmatpush1.bf16.msra.mxu0 %v590
    %656 = vmatprep.mubr.bf16.mxu0 %v419
    %657 = vmatmul.mubr.bf16.gmra.mrb[0].mxu0 %v418
    %v658 = vpop.f32.mrb[0].mxu0
    %v659 = vadd.f32 %v457, %v658
    %v660 = vpop.f32.mrb[0].mxu0
    %v661 = vadd.f32 %v461, %v660
    %v662 = vpop.f32.mrb[0].mxu0
    %v663 = vpop.f32.mrb[0].mxu0
    %664 = vdwg.mxu0
    %vm665 = vcmp.ge.f32.partialorder %v659, 0.0
    %vm666 = vcmp.ge.f32.partialorder %v661, 0.0
    %v667 = vmul.f32 %v659, 0.01
    %v668 = vmul.f32 %v661, 0.01
    %v669 = vsel %vm665, %v659, %v667
    %v670 = vsel %vm666, %v661, %v668
    %v671 = vpack.c.bf16 %v669, %v669
    %v672 = vpack.c.bf16 %v670, %v670
    %v673 = vld [vmem:[#allocation8] sm:$0xff]
    %v674 = vld [vmem:[#allocation8 + $0x8] sm:$0xff]
    %v675 = vld [vmem:[#allocation8 + $0x10] sm:$0xff]
    %v676 = vld [vmem:[#allocation8 + $0x18] sm:$0xff]
    %v677 = vld [vmem:[#allocation8 + $0x20] sm:$0xff]
    %v678 = vld [vmem:[#allocation8 + $0x28] sm:$0xff]
    %v679 = vld [vmem:[#allocation8 + $0x30] sm:$0xff]
    %v680 = vld [vmem:[#allocation8 + $0x38] sm:$0xff]
    %v681 = vld [vmem:[#allocation8 + $0x40] sm:$0xff]
    %v682 = vld [vmem:[#allocation8 + $0x48] sm:$0xff]
    %v683 = vld [vmem:[#allocation8 + $0x50] sm:$0xff]
    %v684 = vld [vmem:[#allocation8 + $0x58] sm:$0xff]
    %v685 = vld [vmem:[#allocation8 + $0x60] sm:$0xff]
    %v686 = vld [vmem:[#allocation8 + $0x68] sm:$0xff]
    %v687 = vld [vmem:[#allocation8 + $0x70] sm:$0xff]
    %v688 = vld [vmem:[#allocation8 + $0x78] sm:$0xff]
    %v689 = vld [vmem:[#allocation8 + $0x80] sm:$0xff]
    %v690 = vld [vmem:[#allocation8 + $0x88] sm:$0xff]
    %v691 = vld [vmem:[#allocation8 + $0x90] sm:$0xff]
    %v692 = vld [vmem:[#allocation8 + $0x98] sm:$0xff]
    %v693 = vld [vmem:[#allocation8 + $0xa0] sm:$0xff]
    %v694 = vld [vmem:[#allocation8 + $0xa8] sm:$0xff]
    %v695 = vld [vmem:[#allocation8 + $0xb0] sm:$0xff]
    %v696 = vld [vmem:[#allocation8 + $0xb8] sm:$0xff]
    %v697 = vld [vmem:[#allocation8 + $0xc0] sm:$0xff]
    %v698 = vld [vmem:[#allocation8 + $0xc8] sm:$0xff]
    %v699 = vld [vmem:[#allocation8 + $0xd0] sm:$0xff]
    %v700 = vld [vmem:[#allocation8 + $0xd8] sm:$0xff]
    %v701 = vld [vmem:[#allocation8 + $0xe0] sm:$0xff]
    %v702 = vld [vmem:[#allocation8 + $0xe8] sm:$0xff]
    %v703 = vld [vmem:[#allocation8 + $0xf0] sm:$0xff]
    %v704 = vld [vmem:[#allocation8 + $0xf8] sm:$0xff]
    %v705 = vld [vmem:[%s8] sm:$0x3]
    %v707 = vlaneseq
    %v708 = vshrl.u32 %v707, 7
    %v709 = vsub.s32 0, %v708
    %v710 = vrot.slane %v705, %v709
    %v711 = vlaneseq
    %v712 = vshrl.u32 %v711, 7
    %v713 = vsub.s32 1, %v712
    %v714 = vrot.slane %v705, %v713
    %v749 = vunpack.c.l.b16 %v673
    %v750 = vunpack.c.h.b16 %v673
    %v751 = vunpack.c.l.b16 %v674
    %v752 = vunpack.c.h.b16 %v674
    %v753 = vunpack.c.l.b16 %v675
    %v754 = vunpack.c.h.b16 %v675
    %v755 = vunpack.c.l.b16 %v676
    %v756 = vunpack.c.h.b16 %v676
    %v757 = vunpack.c.l.b16 %v677
    %v758 = vunpack.c.h.b16 %v677
    %v759 = vunpack.c.l.b16 %v678
    %v760 = vunpack.c.h.b16 %v678
    %v761 = vunpack.c.l.b16 %v679
    %v762 = vunpack.c.h.b16 %v679
    %v763 = vunpack.c.l.b16 %v680
    %v764 = vunpack.c.h.b16 %v680
    %v765 = vunpack.c.l.b16 %v681
    %v766 = vunpack.c.h.b16 %v681
    %v767 = vunpack.c.l.b16 %v682
    %v768 = vunpack.c.h.b16 %v682
    %v769 = vunpack.c.l.b16 %v683
    %v770 = vunpack.c.h.b16 %v683
    %v771 = vunpack.c.l.b16 %v684
    %v772 = vunpack.c.h.b16 %v684
    %v773 = vunpack.c.l.b16 %v685
    %v774 = vunpack.c.h.b16 %v685
    %v775 = vunpack.c.l.b16 %v686
    %v776 = vunpack.c.h.b16 %v686
    %v777 = vunpack.c.l.b16 %v687
    %v778 = vunpack.c.h.b16 %v687
    %v779 = vunpack.c.l.b16 %v688
    %v780 = vunpack.c.h.b16 %v688
    %v781 = vunpack.c.l.b16 %v689
    %v782 = vunpack.c.h.b16 %v689
    %v783 = vunpack.c.l.b16 %v690
    %v784 = vunpack.c.h.b16 %v690
    %v785 = vunpack.c.l.b16 %v691
    %v786 = vunpack.c.h.b16 %v691
    %v787 = vunpack.c.l.b16 %v692
    %v788 = vunpack.c.h.b16 %v692
    %v789 = vunpack.c.l.b16 %v693
    %v790 = vunpack.c.h.b16 %v693
    %v791 = vunpack.c.l.b16 %v694
    %v792 = vunpack.c.h.b16 %v694
    %v793 = vunpack.c.l.b16 %v695
    %v794 = vunpack.c.h.b16 %v695
    %v795 = vunpack.c.l.b16 %v696
    %v796 = vunpack.c.h.b16 %v696
    %v797 = vunpack.c.l.b16 %v697
    %v798 = vunpack.c.h.b16 %v697
    %v799 = vunpack.c.l.b16 %v698
    %v800 = vunpack.c.h.b16 %v698
    %v801 = vunpack.c.l.b16 %v699
    %v802 = vunpack.c.h.b16 %v699
    %v803 = vunpack.c.l.b16 %v700
    %v804 = vunpack.c.h.b16 %v700
    %v805 = vunpack.c.l.b16 %v701
    %v806 = vunpack.c.h.b16 %v701
    %v807 = vunpack.c.l.b16 %v702
    %v808 = vunpack.c.h.b16 %v702
    %v809 = vunpack.c.l.b16 %v703
    %v810 = vunpack.c.h.b16 %v703
    %v811 = vunpack.c.l.b16 %v704
    %v812 = vunpack.c.h.b16 %v704
    %v813 = vpack.c.b16 %v751, %v749
    %v814 = vpack.c.b16 %v752, %v750
    %v815 = vpack.c.b16 %v755, %v753
    %v816 = vpack.c.b16 %v756, %v754
    %v817 = vpack.c.b16 %v759, %v757
    %v818 = vpack.c.b16 %v760, %v758
    %v819 = vpack.c.b16 %v763, %v761
    %v820 = vpack.c.b16 %v764, %v762
    %v821 = vpack.c.b16 %v767, %v765
    %v822 = vpack.c.b16 %v768, %v766
    %v823 = vpack.c.b16 %v771, %v769
    %v824 = vpack.c.b16 %v772, %v770
    %v825 = vpack.c.b16 %v775, %v773
    %v826 = vpack.c.b16 %v776, %v774
    %v827 = vpack.c.b16 %v779, %v777
    %v828 = vpack.c.b16 %v780, %v778
    %v829 = vpack.c.b16 %v783, %v781
    %v830 = vpack.c.b16 %v784, %v782
    %v831 = vpack.c.b16 %v787, %v785
    %v832 = vpack.c.b16 %v788, %v786
    %v833 = vpack.c.b16 %v791, %v789
    %v834 = vpack.c.b16 %v792, %v790
    %v835 = vpack.c.b16 %v795, %v793
    %v836 = vpack.c.b16 %v796, %v794
    %v837 = vpack.c.b16 %v799, %v797
    %v838 = vpack.c.b16 %v800, %v798
    %v839 = vpack.c.b16 %v803, %v801
    %v840 = vpack.c.b16 %v804, %v802
    %v841 = vpack.c.b16 %v807, %v805
    %v842 = vpack.c.b16 %v808, %v806
    %v843 = vpack.c.b16 %v811, %v809
    %v844 = vpack.c.b16 %v812, %v810
    %877 = vmatprep.subr.bf16.mxu0 %v814
    %878 = vmatpush1.bf16.msra.mxu0 %v813
    %879 = vmatprep.subr.bf16.mxu0 %v816
    %880 = vmatpush1.bf16.msra.mxu0 %v815
    %881 = vmatprep.subr.bf16.mxu0 %v818
    %882 = vmatpush1.bf16.msra.mxu0 %v817
    %883 = vmatprep.subr.bf16.mxu0 %v820
    %884 = vmatpush1.bf16.msra.mxu0 %v819
    %885 = vmatprep.subr.bf16.mxu0 %v822
    %886 = vmatpush1.bf16.msra.mxu0 %v821
    %887 = vmatprep.subr.bf16.mxu0 %v824
    %888 = vmatpush1.bf16.msra.mxu0 %v823
    %889 = vmatprep.subr.bf16.mxu0 %v826
    %890 = vmatpush1.bf16.msra.mxu0 %v825
    %891 = vmatprep.subr.bf16.mxu0 %v828
    %892 = vmatpush1.bf16.msra.mxu0 %v827
    %893 = vmatprep.subr.bf16.mxu0 %v830
    %894 = vmatpush1.bf16.msra.mxu0 %v829
    %895 = vmatprep.subr.bf16.mxu0 %v832
    %896 = vmatpush1.bf16.msra.mxu0 %v831
    %897 = vmatprep.subr.bf16.mxu0 %v834
    %898 = vmatpush1.bf16.msra.mxu0 %v833
    %899 = vmatprep.subr.bf16.mxu0 %v836
    %900 = vmatpush1.bf16.msra.mxu0 %v835
    %901 = vmatprep.subr.bf16.mxu0 %v838
    %902 = vmatpush1.bf16.msra.mxu0 %v837
    %903 = vmatprep.subr.bf16.mxu0 %v840
    %904 = vmatpush1.bf16.msra.mxu0 %v839
    %905 = vmatprep.subr.bf16.mxu0 %v842
    %906 = vmatpush1.bf16.msra.mxu0 %v841
    %907 = vmatprep.subr.bf16.mxu0 %v844
    %908 = vmatpush1.bf16.msra.mxu0 %v843
    %909 = vmatprep.mubr.bf16.mxu0 %v672
    %910 = vmatmul.mubr.bf16.gmra.mrb[0].mxu0 %v671
    %v911 = vpop.f32.mrb[0].mxu0
    %v912 = vadd.f32 %v710, %v911
    %v913 = vpop.f32.mrb[0].mxu0
    %v914 = vadd.f32 %v714, %v913
    %v915 = vpop.f32.mrb[0].mxu0
    %v916 = vpop.f32.mrb[0].mxu0
    %917 = vdwg.mxu0
    %vm918 = vcmp.ge.f32.partialorder %v912, 0.0
    %vm919 = vcmp.ge.f32.partialorder %v914, 0.0
    %v920 = vmul.f32 %v912, 0.01
    %v921 = vmul.f32 %v914, 0.01
    %v922 = vsel %vm918, %v912, %v920
    %v923 = vsel %vm919, %v914, %v921
    %v924 = vpack.c.bf16 %v922, %v922
    %v925 = vpack.c.bf16 %v923, %v923
    %v926 = vld [vmem:[%s9] sm:$0xf]
    %v927 = vld [vmem:[%s9 + $0x4] sm:$0xf]
    %v928 = vld [vmem:[%s9 + $0x8] sm:$0xf]
    %v929 = vld [vmem:[%s9 + $0xc] sm:$0xf]
    %v930 = vld [vmem:[%s9 + $0x10] sm:$0xf]
    %v931 = vld [vmem:[%s9 + $0x14] sm:$0xf]
    %v932 = vld [vmem:[%s9 + $0x18] sm:$0xf]
    %v933 = vld [vmem:[%s9 + $0x1c] sm:$0xf]
    %v934 = vld [vmem:[%s9 + $0x20] sm:$0xf]
    %v935 = vld [vmem:[%s9 + $0x24] sm:$0xf]
    %v936 = vld [vmem:[%s9 + $0x28] sm:$0xf]
    %v937 = vld [vmem:[%s9 + $0x2c] sm:$0xf]
    %v938 = vld [vmem:[%s9 + $0x30] sm:$0xf]
    %v939 = vld [vmem:[%s9 + $0x34] sm:$0xf]
    %v940 = vld [vmem:[%s9 + $0x38] sm:$0xf]
    %v941 = vld [vmem:[%s9 + $0x3c] sm:$0xf]
    %v942 = vld [vmem:[%s9 + $0x40] sm:$0xf]
    %v943 = vld [vmem:[%s9 + $0x44] sm:$0xf]
    %v944 = vld [vmem:[%s9 + $0x48] sm:$0xf]
    %v945 = vld [vmem:[%s9 + $0x4c] sm:$0xf]
    %v946 = vld [vmem:[%s9 + $0x50] sm:$0xf]
    %v947 = vld [vmem:[%s9 + $0x54] sm:$0xf]
    %v948 = vld [vmem:[%s9 + $0x58] sm:$0xf]
    %v949 = vld [vmem:[%s9 + $0x5c] sm:$0xf]
    %v950 = vld [vmem:[%s9 + $0x60] sm:$0xf]
    %v951 = vld [vmem:[%s9 + $0x64] sm:$0xf]
    %v952 = vld [vmem:[%s9 + $0x68] sm:$0xf]
    %v953 = vld [vmem:[%s9 + $0x6c] sm:$0xf]
    %v954 = vld [vmem:[%s9 + $0x70] sm:$0xf]
    %v955 = vld [vmem:[%s9 + $0x74] sm:$0xf]
    %v956 = vld [vmem:[%s9 + $0x78] sm:$0xf]
    %v957 = vld [vmem:[%s9 + $0x7c] sm:$0xf]
    %v958 = vld [vmem:[#allocation2] sm:$0x1]
    %v960 = vlaneseq
    %v961 = vshrl.u32 %v960, 7
    %v962 = vsub.s32 0, %v961
    %v963 = vrot.slane %v958, %v962
    %v997 = vunpack.c.l.b16 %v926
    %v998 = vunpack.c.l.b16 %v927
    %v999 = vunpack.c.l.b16 %v928
    %v1000 = vunpack.c.l.b16 %v929
    %v1001 = vunpack.c.l.b16 %v930
    %v1002 = vunpack.c.l.b16 %v931
    %v1003 = vunpack.c.l.b16 %v932
    %v1004 = vunpack.c.l.b16 %v933
    %v1005 = vunpack.c.l.b16 %v934
    %v1006 = vunpack.c.l.b16 %v935
    %v1007 = vunpack.c.l.b16 %v936
    %v1008 = vunpack.c.l.b16 %v937
    %v1009 = vunpack.c.l.b16 %v938
    %v1010 = vunpack.c.l.b16 %v939
    %v1011 = vunpack.c.l.b16 %v940
    %v1012 = vunpack.c.l.b16 %v941
    %v1013 = vunpack.c.l.b16 %v942
    %v1014 = vunpack.c.l.b16 %v943
    %v1015 = vunpack.c.l.b16 %v944
    %v1016 = vunpack.c.l.b16 %v945
    %v1017 = vunpack.c.l.b16 %v946
    %v1018 = vunpack.c.l.b16 %v947
    %v1019 = vunpack.c.l.b16 %v948
    %v1020 = vunpack.c.l.b16 %v949
    %v1021 = vunpack.c.l.b16 %v950
    %v1022 = vunpack.c.l.b16 %v951
    %v1023 = vunpack.c.l.b16 %v952
    %v1024 = vunpack.c.l.b16 %v953
    %v1025 = vunpack.c.l.b16 %v954
    %v1026 = vunpack.c.l.b16 %v955
    %v1027 = vunpack.c.l.b16 %v956
    %v1028 = vunpack.c.l.b16 %v957
    %v1029 = vpack.c.b16 %v998, %v997
    %v1030 = vpack.c.b16 %v1000, %v999
    %v1031 = vpack.c.b16 %v1002, %v1001
    %v1032 = vpack.c.b16 %v1004, %v1003
    %v1033 = vpack.c.b16 %v1006, %v1005
    %v1034 = vpack.c.b16 %v1008, %v1007
    %v1035 = vpack.c.b16 %v1010, %v1009
    %v1036 = vpack.c.b16 %v1012, %v1011
    %v1037 = vpack.c.b16 %v1014, %v1013
    %v1038 = vpack.c.b16 %v1016, %v1015
    %v1039 = vpack.c.b16 %v1018, %v1017
    %v1040 = vpack.c.b16 %v1020, %v1019
    %v1041 = vpack.c.b16 %v1022, %v1021
    %v1042 = vpack.c.b16 %v1024, %v1023
    %v1043 = vpack.c.b16 %v1026, %v1025
    %v1044 = vpack.c.b16 %v1028, %v1027
    %1061 = vmatprep.subr.bf16.mxu0 0
    %1062 = vmatpush1.bf16.msra.mxu0 %v1029
    %1063 = vmatprep.subr.bf16.mxu0 0
    %1064 = vmatpush1.bf16.msra.mxu0 %v1030
    %1065 = vmatprep.subr.bf16.mxu0 0
    %1066 = vmatpush1.bf16.msra.mxu0 %v1031
    %1067 = vmatprep.subr.bf16.mxu0 0
    %1068 = vmatpush1.bf16.msra.mxu0 %v1032
    %1069 = vmatprep.subr.bf16.mxu0 0
    %1070 = vmatpush1.bf16.msra.mxu0 %v1033
    %1071 = vmatprep.subr.bf16.mxu0 0
    %1072 = vmatpush1.bf16.msra.mxu0 %v1034
    %1073 = vmatprep.subr.bf16.mxu0 0
    %1074 = vmatpush1.bf16.msra.mxu0 %v1035
    %1075 = vmatprep.subr.bf16.mxu0 0
    %1076 = vmatpush1.bf16.msra.mxu0 %v1036
    %1077 = vmatprep.subr.bf16.mxu0 0
    %1078 = vmatpush1.bf16.msra.mxu0 %v1037
    %1079 = vmatprep.subr.bf16.mxu0 0
    %1080 = vmatpush1.bf16.msra.mxu0 %v1038
    %1081 = vmatprep.subr.bf16.mxu0 0
    %1082 = vmatpush1.bf16.msra.mxu0 %v1039
    %1083 = vmatprep.subr.bf16.mxu0 0
    %1084 = vmatpush1.bf16.msra.mxu0 %v1040
    %1085 = vmatprep.subr.bf16.mxu0 0
    %1086 = vmatpush1.bf16.msra.mxu0 %v1041
    %1087 = vmatprep.subr.bf16.mxu0 0
    %1088 = vmatpush1.bf16.msra.mxu0 %v1042
    %1089 = vmatprep.subr.bf16.mxu0 0
    %1090 = vmatpush1.bf16.msra.mxu0 %v1043
    %1091 = vmatprep.subr.bf16.mxu0 0
    %1092 = vmatpush1.bf16.msra.mxu0 %v1044
    %1093 = vmatprep.mubr.bf16.mxu0 %v925
    %1094 = vmatmul.mubr.bf16.gmra.mrb[0].mxu0 %v924
    %v1095 = vpop.f32.mrb[0].mxu0
    %v1096 = vadd.f32 %v963, %v1095
    %v1097 = vpop.f32.mrb[0].mxu0
    %v1098 = vpop.f32.mrb[0].mxu0
    %v1099 = vpop.f32.mrb[0].mxu0
    %1100 = vdwg.mxu0
    %v1101 = vsub.f32 0.0, %v1096
    %v1102 = vmul.f32 %v1101, 1.442695
    %v1103 = vpow.pop %v1102
    %v1104 = vadd.f32 %v1103, 1.0
    %v1105 = vrcp.pop %v1104
    %1107 = vset.pattern.permute.xlu0 0
    %1108 = vperm.xlu0 %1107, %v1105
    %v1109 = vpop.permute.xlu0 %1108
    %v1110 = vlaneseq
    %v1111 = vand.u32 %v1110, 127
    %v1112 = vlaneseq
    %v1113 = vshrl.u32 %v1112, 7
    %v1114 = vsub.s32 %v1111, %v1113
    %v1115 = vrot.slane %v1109, %v1114
    %vm1117 = vcmask 57344
    %1118 = vst.msk [vmem:[#allocation9] sm:$0x1] %vm1117, %v1115
    // Predicated region
    $region58: #{tpu_custom_call.1} parent=1 // pred_check
      _
    $region59: #{tpu_custom_call.1} parent=1 // pred_check_branch
      %1120 = sbr.rel (0) target = $region61
    $region60: #{tpu_custom_call.1} parent=1 // pred_region
      %s1122 = ssub.s32 16, 16
      %1123 = vsyncadd [#allocation5], %s1122
      %s1125 = sshll.u32 [#allocation9], 4
      %s1126 = int_to_ptr.vmem [resolvable:$true] %s1125
      %1128 = dma.vmem_to_hbm [thread:$0]  %s1126, 16, %s11, [#allocation5]
    $region61: #{tpu_custom_call.1} parent=1 // pred_fallthru
      _
    // Predicated region
    $region62: #{tpu_custom_call.1} parent=1 // pred_check
      _
    $region63: #{tpu_custom_call.1} parent=1 // pred_check_branch
      %1130 = sbr.rel (0) target = $region65
    $region64: #{tpu_custom_call.1} parent=1 // pred_region
      %1131 = dma.done [#allocation5], 16
    $region65: #{tpu_custom_call.1} parent=1 // pred_fallthru
      _
    %1132 = vsyncpa [#allocation4], 1
    %1133 = vsyncpa [#allocation7], 1
    %1134 = vsyncpa [#allocation5], 1

</llo_original>
